<compile_context>
chip_gen: v6e
topology: v6e:2x2x1
jax: 0.10.0
libtpu: 0.0.40
codegen_flags: <defaults>
</compile_context>

<pallas_src>
import jax
import jax.numpy as jnp
from jax.experimental import pallas as pl
from jax.experimental.pallas import tpu as pltpu

INPUT_SIZE = 28 * 28      # 784 (K dim; left unpadded, compiler pads last MXU sub-tile)
HIDDEN_SIZE = 100
NUM_CLASSES = 10
HIDDEN_PAD = 128          # lane-aligned hidden width (zero-padded cols contribute 0)
OUT_PAD = 128             # lane-aligned output width (sliced back to 10 in wrapper)
MAX_TILE_B = 2048         # per-step batch tile (multiple of 16); ~15 MiB double-buffered


def _round_up(v, m):
    return -(-v // m) * m


def mlp_kernel(x_ref, w1t_ref, b1_ref, w2t_ref, b2_ref, o_ref):
    # out = relu(x @ W1t + b1) @ W2t + b2
    # x arrives f32 from HBM and is cast to bf16 here (VPU, free vs. HBM-bound kernel);
    # matmuls run bf16 on the MXU with f32 accumulate; bias add + ReLU in f32;
    # final store is bf16 and lane-dense (OUT_PAD = 128 -> unmasked vst).
    x = x_ref[...].astype(jnp.bfloat16)
    h = jnp.dot(x, w1t_ref[...], preferred_element_type=jnp.float32)
    h = jnp.maximum(h + b1_ref[...], 0.0)
    out = jnp.dot(h.astype(jnp.bfloat16), w2t_ref[...],
                  preferred_element_type=jnp.float32)
    o_ref[...] = (out + b2_ref[...]).astype(jnp.bfloat16)


def prepare_params(w1, b1, w2, b2):
    """One-time prep: transpose PyTorch (out,in) weights to (in,out), zero-pad to
    lane-aligned widths, cast weights to bf16 (biases stay f32)."""
    w1t = jnp.zeros((INPUT_SIZE, HIDDEN_PAD), jnp.bfloat16)
    w1t = w1t.at[:, :HIDDEN_SIZE].set(w1.T.astype(jnp.bfloat16))
    b1p = jnp.zeros((1, HIDDEN_PAD), jnp.float32)
    b1p = b1p.at[:, :HIDDEN_SIZE].set(b1.reshape(1, HIDDEN_SIZE).astype(jnp.float32))
    w2t = jnp.zeros((HIDDEN_PAD, OUT_PAD), jnp.bfloat16)
    w2t = w2t.at[:HIDDEN_SIZE, :NUM_CLASSES].set(w2.T.astype(jnp.bfloat16))
    b2p = jnp.zeros((1, OUT_PAD), jnp.float32)
    b2p = b2p.at[:, :NUM_CLASSES].set(b2.reshape(1, NUM_CLASSES).astype(jnp.float32))
    return w1t, b1p, w2t, b2p


@jax.jit
def neural_net_forward(x, w1t, b1p, w2t, b2p):
    B = x.shape[0]
    # Batch tile: multiple of 16 (bf16 (16,128) min tile), chosen so the grid has >= 2
    # steps whenever B > 16 (keeps both v7x TensorCores busy), capped at MAX_TILE_B.
    tile_b = min(MAX_TILE_B, max(16, _round_up(pl.cdiv(B, 2), 16)))
    grid_b = pl.cdiv(B, tile_b)

    out = pl.pallas_call(
        mlp_kernel,
        # Output rows padded to a whole number of tiles so every output block is full;
        # extra rows (and cols 10..127) are sliced off below.
        out_shape=jax.ShapeDtypeStruct((grid_b * tile_b, OUT_PAD), jnp.bfloat16),
        grid_spec=pltpu.PrefetchScalarGridSpec(
            num_scalar_prefetch=0,
            grid=(grid_b,),
            in_specs=[
                pl.BlockSpec((tile_b, INPUT_SIZE), lambda i: (i, 0)),      # x tile (f32), pipelined; ragged last block OK
                pl.BlockSpec((INPUT_SIZE, HIDDEN_PAD), lambda i: (0, 0)),  # W1t resident
                pl.BlockSpec((1, HIDDEN_PAD), lambda i: (0, 0)),           # b1 resident
                pl.BlockSpec((HIDDEN_PAD, OUT_PAD), lambda i: (0, 0)),     # W2t resident
                pl.BlockSpec((1, OUT_PAD), lambda i: (0, 0)),              # b2 resident
            ],
            out_specs=pl.BlockSpec((tile_b, OUT_PAD), lambda i: (i, 0)),
        ),
        compiler_params=pltpu.CompilerParams(
            dimension_semantics=("parallel",),      # shard batch tiles across TCs on v7x
            vmem_limit_bytes=32 * 1024 * 1024,      # covers 2048-row f32 x tiles on v5e too
        ),
    )(x, w1t, b1p, w2t, b2p)

    # NOTE: do not reduce across batch rows before this slice — rows >= B are undefined.
    return out[:B, :NUM_CLASSES].astype(jnp.float32)


def init_params(key):
    # Deterministic PyTorch-like init: U(-1/sqrt(fan_in), 1/sqrt(fan_in)), PyTorch layout.
    k1, k2, k3, k4 = jax.random.split(key, 4)
    bound1 = 1.0 / (INPUT_SIZE ** 0.5)
    bound2 = 1.0 / (HIDDEN_SIZE ** 0.5)
    w1 = jax.random.uniform(k1, (HIDDEN_SIZE, INPUT_SIZE), jnp.float32, -bound1, bound1)
    b1 = jax.random.uniform(k2, (1, HIDDEN_SIZE), jnp.float32, -bound1, bound1)
    w2 = jax.random.uniform(k3, (NUM_CLASSES, HIDDEN_SIZE), jnp.float32, -bound2, bound2)
    b2 = jax.random.uniform(k4, (1, NUM_CLASSES), jnp.float32, -bound2, bound2)
    return w1, b1, w2, b2


if __name__ == "__main__":
    key = jax.random.PRNGKey(0)
    pkey, xkey = jax.random.split(key)
    w1, b1, w2, b2 = init_params(pkey)
    w1t, b1p, w2t, b2p = prepare_params(w1, b1, w2, b2)

    B = 24  # small batch; > 16 so the grid has 2 steps and exercises the ragged last block
    x = jax.random.normal(xkey, (B, INPUT_SIZE), jnp.float32)

    out = neural_net_forward(x, w1t, b1p, w2t, b2p)
    out = jax.block_until_ready(out)
    assert out.shape == (B, NUM_CLASSES)
    assert bool(jnp.all(jnp.isfinite(out)))

    # Tight check against a bf16-consistent reference (same quantization as the kernel,
    # including the final bf16 store).
    xb = x.astype(jnp.bfloat16).astype(jnp.float32)
    w1b = w1.astype(jnp.bfloat16).astype(jnp.float32)
    w2b = w2.astype(jnp.bfloat16).astype(jnp.float32)
    h_ref = jnp.maximum(xb @ w1b.T + b1, 0.0)
    ref_bf16 = (h_ref.astype(jnp.bfloat16).astype(jnp.float32) @ w2b.T + b2)
    ref_bf16 = ref_bf16.astype(jnp.bfloat16).astype(jnp.float32)
    assert jnp.allclose(out, ref_bf16, atol=1e-2, rtol=1e-2)

    # Loose check against the full-f32 PyTorch-equivalent forward (bf16 quantization only).
    ref_f32 = jnp.maximum(x @ w1.T + b1, 0.0) @ w2.T + b2
    assert jnp.allclose(out, ref_f32, atol=6e-2, rtol=6e-2)

    print("KERNEL_OK")
</pallas_src>

<mosaic_0001>
module attributes {stable_mosaic.version = 11 : i64} {
  func.func @mlp_kernel(%arg0: i32, %arg1: memref<16x784xf32, #tpu.memory_space<vmem>>, %arg2: memref<784x128xbf16, #tpu.memory_space<vmem>>, %arg3: memref<1x128xf32, #tpu.memory_space<vmem>>, %arg4: memref<128x128xbf16, #tpu.memory_space<vmem>>, %arg5: memref<1x128xf32, #tpu.memory_space<vmem>>, %arg6: memref<16x128xbf16, #tpu.memory_space<vmem>>) attributes {dimension_semantics = [#tpu.dimension_semantics<parallel>], iteration_bounds = array<i64: 2>, scalar_prefetch = 0 : i64, scratch_operands = 0 : i64, tpu.core_type = #tpu.core_type<tc>, window_params = [{transform_indices = @transform_0, window_bounds = array<i64: 16, 784>}, {pipeline_mode = #tpu.pipeline_mode<synchronous>, transform_indices = @transform_1, window_bounds = array<i64: 784, 128>}, {pipeline_mode = #tpu.pipeline_mode<synchronous>, transform_indices = @transform_2, window_bounds = array<i64: 1, 128>}, {pipeline_mode = #tpu.pipeline_mode<synchronous>, transform_indices = @transform_3, window_bounds = array<i64: 128, 128>}, {pipeline_mode = #tpu.pipeline_mode<synchronous>, transform_indices = @transform_4, window_bounds = array<i64: 1, 128>}, {transform_indices = @transform_5, window_bounds = array<i64: 16, 128>}]} {
    %c0 = arith.constant 0 : index
    %c0_0 = arith.constant 0 : index
    %0 = vector.load %arg1[%c0, %c0_0] : memref<16x784xf32, #tpu.memory_space<vmem>>, vector<16x784xf32>
    %1 = arith.truncf %0 : vector<16x784xf32> to vector<16x784xbf16>
    %c0_1 = arith.constant 0 : index
    %c0_2 = arith.constant 0 : index
    %2 = vector.load %arg2[%c0_1, %c0_2] : memref<784x128xbf16, #tpu.memory_space<vmem>>, vector<784x128xbf16>
    %cst = arith.constant dense<0.000000e+00> : vector<16x128xf32>
    %3 = tpu.matmul %1, %2, %cst {dimension_numbers = #tpu.dot_dimension_numbers<[1], [0], [0], [1], [0, 0, 1, 1], [], []>} : vector<16x784xbf16>, vector<784x128xbf16>, vector<16x128xf32> -> vector<16x128xf32>
    %c0_3 = arith.constant 0 : index
    %c0_4 = arith.constant 0 : index
    %4 = vector.load %arg3[%c0_3, %c0_4] : memref<1x128xf32, #tpu.memory_space<vmem>>, vector<1x128xf32>
    %5 = vector.broadcast %4 : vector<1x128xf32> to vector<16x128xf32>
    %6 = arith.addf %3, %5 : vector<16x128xf32>
    %cst_5 = arith.constant 0.000000e+00 : f32
    %7 = vector.broadcast %cst_5 : f32 to vector<16x128xf32>
    %8 = arith.maximumf %6, %7 : vector<16x128xf32>
    %9 = arith.truncf %8 : vector<16x128xf32> to vector<16x128xbf16>
    %c0_6 = arith.constant 0 : index
    %c0_7 = arith.constant 0 : index
    %10 = vector.load %arg4[%c0_6, %c0_7] : memref<128x128xbf16, #tpu.memory_space<vmem>>, vector<128x128xbf16>
    %cst_8 = arith.constant dense<0.000000e+00> : vector<16x128xf32>
    %11 = tpu.matmul %9, %10, %cst_8 {dimension_numbers = #tpu.dot_dimension_numbers<[1], [0], [0], [1], [0, 0, 1, 1], [], []>} : vector<16x128xbf16>, vector<128x128xbf16>, vector<16x128xf32> -> vector<16x128xf32>
    %c0_9 = arith.constant 0 : index
    %c0_10 = arith.constant 0 : index
    %12 = vector.load %arg5[%c0_9, %c0_10] : memref<1x128xf32, #tpu.memory_space<vmem>>, vector<1x128xf32>
    %13 = vector.broadcast %12 : vector<1x128xf32> to vector<16x128xf32>
    %14 = arith.addf %11, %13 : vector<16x128xf32>
    %15 = arith.truncf %14 : vector<16x128xf32> to vector<16x128xbf16>
    %c0_11 = arith.constant 0 : index
    %c0_12 = arith.constant 0 : index
    %16 = vector.load %arg6[%c0_11, %c0_12] : memref<16x128xbf16, #tpu.memory_space<vmem>>, vector<16x128xbf16>
    tpu.vector_store %arg6[%c0_11, %c0_12], %15 {strides = array<i32>} : memref<16x128xbf16, #tpu.memory_space<vmem>>, vector<16x128xbf16>,
    return
  }
  func.func @transform_0(%arg0: i32) -> (i32, i32) {
    %c0_i32 = arith.constant 0 : i32
    %c0_i32_0 = arith.constant 0 : i32
    return %arg0, %c0_i32 : i32, i32
  }
  func.func @transform_1(%arg0: i32) -> (i32, i32) {
    %c0_i32 = arith.constant 0 : i32
    %c0_i32_0 = arith.constant 0 : i32
    %c0_i32_1 = arith.constant 0 : i32
    return %c0_i32, %c0_i32_0 : i32, i32
  }
  func.func @transform_2(%arg0: i32) -> (i32, i32) {
    %c0_i32 = arith.constant 0 : i32
    %c0_i32_0 = arith.constant 0 : i32
    %c0_i32_1 = arith.constant 0 : i32
    return %c0_i32, %c0_i32_0 : i32, i32
  }
  func.func @transform_3(%arg0: i32) -> (i32, i32) {
    %c0_i32 = arith.constant 0 : i32
    %c0_i32_0 = arith.constant 0 : i32
    %c0_i32_1 = arith.constant 0 : i32
    return %c0_i32, %c0_i32_0 : i32, i32
  }
  func.func @transform_4(%arg0: i32) -> (i32, i32) {
    %c0_i32 = arith.constant 0 : i32
    %c0_i32_0 = arith.constant 0 : i32
    %c0_i32_1 = arith.constant 0 : i32
    return %c0_i32, %c0_i32_0 : i32, i32
  }
  func.func @transform_5(%arg0: i32) -> (i32, i32) {
    %c0_i32 = arith.constant 0 : i32
    %c0_i32_0 = arith.constant 0 : i32
    return %arg0, %c0_i32 : i32, i32
  }
}

</mosaic_0001>

<llo_original>
// kernel: neural_net_forward.1
$region0: #{neural_net_forward.1}
  #allocation0 [shape = 'u32[]', space=smem, size = 0x4, offset = 0x4, fixed_abs, tag = 'smem constant byte address 0x4 - core index']
  #allocation1 [shape = 'u32[144,128]{1,0:T(1,128)}', space=vmem, size = 0x12000, scoped, tag = 'internal scratch']
  %s0 = inlined_call_operand.hbm [shape: f32[24,784], index: 0, kind: input, shape index: {}]
  %s1 = inlined_call_operand.hbm [shape: bf16[784,128], index: 1, kind: input, shape index: {}]
  %s2 = inlined_call_operand.vmem [shape: f32[1,128], index: 2, kind: input, shape index: {}]
  %s3 = inlined_call_operand.hbm [shape: bf16[128,128], index: 3, kind: input, shape index: {}]
  %s4 = inlined_call_operand.vmem [shape: f32[1,128], index: 4, kind: input, shape index: {}]
  %s5 = inlined_call_operand.vmem [shape: bf16[32,128], index: 5, kind: output, shape index: {}]
  %s6 = sld [smem:[#allocation0]]
  $region65: #{neural_net_forward.1} parent=0
    _
  %s8 = ssub.s32 1, %s6
  %s9 = scalar_select 0, %s8, %s6
  $region1: #{neural_net_forward.1} parent=0
    #allocation2 [shape = 'u8[114688]{0}', space=vmem, size = 0x1c000, scoped, tag = 'input window, operand 0']
    #allocation3 [shape = 's32[2]{0}', space=sflag, size = 0x8, scoped, tag = 'scoped memory for neural_net_forward.1']
    #allocation4 [shape = 'u8[200704]{0}', space=vmem, size = 0x31000, scoped, tag = 'input window, operand 1, single buffered']
    #allocation5 [shape = 's32[1]{0}', space=sflag, size = 0x4, scoped, tag = 'scoped memory for neural_net_forward.1']
    #allocation6 [shape = 'u8[32768]{0}', space=vmem, size = 0x8000, scoped, tag = 'input window, operand 3, single buffered']
    %10 = vsyncpa [#allocation3], 0
    %s11 = scalar_lea.sflag [#allocation3], 1
    %12 = vsyncpa %s11, 0
    %13 = vsyncpa [#allocation5], 0
    loop: start=0, step=1, limit=4
    $region2: #{neural_net_forward.1} parent=1 // loop_pre_header
      _
    $region3: #{neural_net_forward.1} parent=1 // loop_header
      %s15 = sphi 0, %s19
      %p16 = scmp.ge.s32.totalorder %s15, 4
      %s25 = sphi 0, %s27
      %s28 = sphi 0, %s25
      %s29 = sphi 0, %s28
      %s45 = sphi 0, %s29
      %s49 = sphi 0, %s49
      %s51 = sphi 0, %s49
      %s52 = sphi 0, %s51
      %s66 = sphi 0, %s52
      %s70 = sphi 0, %s70
      %s72 = sphi 0, %s70
      %s73 = sphi 0, %s72
      %s87 = sphi 0, %s73
      %s91 = sphi 0, %s91
      %s93 = sphi 0, %s91
      %s94 = sphi 0, %s93
      %s108 = sphi 0, %s94
      %s112 = sphi 0, %s112
      %s114 = sphi 0, %s112
      %s115 = sphi 0, %s114
      %s129 = sphi 0, %s115
      %s135 = sphi 0, %s137
      %s138 = sphi 0, %s135
      %s139 = sphi 0, %s138
      %s155 = sphi 0, %s139
    $region4: #{neural_net_forward.1} parent=1 // loop_header_branch
      %18 = sbr.rel (%p16) target = $region8
    $region5: #{neural_net_forward.1} parent=1 // loop_body
      %s20 = ssub.s32 %s15, 1
      %s21 = ssub.s32 %s15, 2
      %s22 = sadd.s32 %s15, 1
      %s23 = ssub.s32 %s15, %s22
      %p24 = scmp.eq.s32.totalorder %s23, 0
      %s26 = sadd.s32 %s25, 1
      %s27 = scalar_select %p24, %s25, %s26
      %p30 = pneg %p24
      %p31 = scmp.eq.s32.totalorder %s15, 1
      %p32 = por %p30, %p31
      %p33 = scmp.ne.s32.totalorder %s25, %s28
      %p34 = scmp.eq.s32.totalorder %s15, 0
      %p35 = por %p33, %p34
      %p36 = scmp.ne.s32.totalorder %s25, %s28
      %p37 = scmp.eq.s32.totalorder %s20, 1
      %p38 = por %p36, %p37
      %p39 = scmp.ne.s32.totalorder %s28, %s29
      %p40 = scmp.eq.s32.totalorder %s20, 0
      %p41 = por %p39, %p40
      %p42 = scmp.ne.s32.totalorder %s28, %s29
      %p43 = scmp.eq.s32.totalorder %s21, 1
      %p44 = por %p42, %p43
      %p46 = scmp.ne.s32.totalorder %s29, %s45
      %p47 = scmp.eq.s32.totalorder %s21, 0
      %p48 = por %p46, %p47
      %s50 = sadd.s32 %s49, 1
      %p53 = scmp.eq.s32.totalorder %s15, 1
      %p54 = scmp.ne.s32.totalorder %s49, %s51
      %p55 = scmp.eq.s32.totalorder %s15, 0
      %p56 = por %p54, %p55
      %p57 = scmp.ne.s32.totalorder %s49, %s51
      %p58 = scmp.eq.s32.totalorder %s20, 1
      %p59 = por %p57, %p58
      %p60 = scmp.ne.s32.totalorder %s51, %s52
      %p61 = scmp.eq.s32.totalorder %s20, 0
      %p62 = por %p60, %p61
      %p63 = scmp.ne.s32.totalorder %s51, %s52
      %p64 = scmp.eq.s32.totalorder %s21, 1
      %p65 = por %p63, %p64
      %p67 = scmp.ne.s32.totalorder %s52, %s66
      %p68 = scmp.eq.s32.totalorder %s21, 0
      %p69 = por %p67, %p68
      %s71 = sadd.s32 %s70, 1
      %p74 = scmp.eq.s32.totalorder %s15, 1
      %p75 = scmp.ne.s32.totalorder %s70, %s72
      %p76 = scmp.eq.s32.totalorder %s15, 0
      %p77 = por %p75, %p76
      %p78 = scmp.ne.s32.totalorder %s70, %s72
      %p79 = scmp.eq.s32.totalorder %s20, 1
      %p80 = por %p78, %p79
      %p81 = scmp.ne.s32.totalorder %s72, %s73
      %p82 = scmp.eq.s32.totalorder %s20, 0
      %p83 = por %p81, %p82
      %p84 = scmp.ne.s32.totalorder %s72, %s73
      %p85 = scmp.eq.s32.totalorder %s21, 1
      %p86 = por %p84, %p85
      %p88 = scmp.ne.s32.totalorder %s73, %s87
      %p89 = scmp.eq.s32.totalorder %s21, 0
      %p90 = por %p88, %p89
      %s92 = sadd.s32 %s91, 1
      %p95 = scmp.eq.s32.totalorder %s15, 1
      %p96 = scmp.ne.s32.totalorder %s91, %s93
      %p97 = scmp.eq.s32.totalorder %s15, 0
      %p98 = por %p96, %p97
      %p99 = scmp.ne.s32.totalorder %s91, %s93
      %p100 = scmp.eq.s32.totalorder %s20, 1
      %p101 = por %p99, %p100
      %p102 = scmp.ne.s32.totalorder %s93, %s94
      %p103 = scmp.eq.s32.totalorder %s20, 0
      %p104 = por %p102, %p103
      %p105 = scmp.ne.s32.totalorder %s93, %s94
      %p106 = scmp.eq.s32.totalorder %s21, 1
      %p107 = por %p105, %p106
      %p109 = scmp.ne.s32.totalorder %s94, %s108
      %p110 = scmp.eq.s32.totalorder %s21, 0
      %p111 = por %p109, %p110
      %s113 = sadd.s32 %s112, 1
      %p116 = scmp.eq.s32.totalorder %s15, 1
      %p117 = scmp.ne.s32.totalorder %s112, %s114
      %p118 = scmp.eq.s32.totalorder %s15, 0
      %p119 = por %p117, %p118
      %p120 = scmp.ne.s32.totalorder %s112, %s114
      %p121 = scmp.eq.s32.totalorder %s20, 1
      %p122 = por %p120, %p121
      %p123 = scmp.ne.s32.totalorder %s114, %s115
      %p124 = scmp.eq.s32.totalorder %s20, 0
      %p125 = por %p123, %p124
      %p126 = scmp.ne.s32.totalorder %s114, %s115
      %p127 = scmp.eq.s32.totalorder %s21, 1
      %p128 = por %p126, %p127
      %p130 = scmp.ne.s32.totalorder %s115, %s129
      %p131 = scmp.eq.s32.totalorder %s21, 0
      %p132 = por %p130, %p131
      %s133 = ssub.s32 %s15, %s22
      %p134 = scmp.eq.s32.totalorder %s133, 0
      %s136 = sadd.s32 %s135, 1
      %s137 = scalar_select %p134, %s135, %s136
      %p140 = pneg %p134
      %p141 = scmp.eq.s32.totalorder %s15, 1
      %p142 = por %p140, %p141
      %p143 = scmp.ne.s32.totalorder %s135, %s138
      %p144 = scmp.eq.s32.totalorder %s15, 0
      %p145 = por %p143, %p144
      %p146 = scmp.ne.s32.totalorder %s135, %s138
      %p147 = scmp.eq.s32.totalorder %s20, 1
      %p148 = por %p146, %p147
      %p149 = scmp.ne.s32.totalorder %s138, %s139
      %p150 = scmp.eq.s32.totalorder %s20, 0
      %p151 = por %p149, %p150
      %p152 = scmp.ne.s32.totalorder %s138, %s139
      %p153 = scmp.eq.s32.totalorder %s21, 1
      %p154 = por %p152, %p153
      %p156 = scmp.ne.s32.totalorder %s139, %s155
      %p157 = scmp.eq.s32.totalorder %s21, 0
      %p158 = por %p156, %p157
      %p159 = scmp.le.s32.totalorder 1, %s15
      %p160 = scmp.lt.s32.totalorder %s15, 3
      %p161 = pnand %p159, %p160
      %p162 = pneg %p161
      // Predicated region
      $region9: #{neural_net_forward.1} parent=5 // pred_check
        _
      $region10: #{neural_net_forward.1} parent=5 // pred_check_branch
        %164 = sbr.rel (%p161) target = $region12
      $region11: #{neural_net_forward.1} parent=5 // pred_region
        %s165 = ssub.s32 %s15, 1
        // Predicated region
        $region13: #{neural_net_forward.1} parent=11 // pred_check
          %p166 = pneg %p62
        $region14: #{neural_net_forward.1} parent=11 // pred_check_branch
          %168 = sbr.rel (%p166) target = $region16
        $region15: #{neural_net_forward.1} parent=11 // pred_region
          %s170 = ssub.s32 6272, 6272
          %171 = vsyncadd [#allocation5], %s170
          %s172 = sshll.u32 [#allocation4], 4
          %s173 = int_to_ptr.vmem [resolvable:$true] %s172
          %178 = dma.hbm_to_vmem [thread:$0]  %s1, 6272, %s173, [#allocation5], 64, 64, 4
        $region16: #{neural_net_forward.1} parent=11 // pred_fallthru
          _
        // Predicated region
        $region17: #{neural_net_forward.1} parent=11 // pred_check
          %p179 = pneg %p83
        $region18: #{neural_net_forward.1} parent=11 // pred_check_branch
          %181 = sbr.rel (%p179) target = $region20
        $region19: #{neural_net_forward.1} parent=11 // pred_region
          _
        $region20: #{neural_net_forward.1} parent=11 // pred_fallthru
          _
        // Predicated region
        $region21: #{neural_net_forward.1} parent=11 // pred_check
          %p182 = pneg %p104
        $region22: #{neural_net_forward.1} parent=11 // pred_check_branch
          %184 = sbr.rel (%p182) target = $region24
        $region23: #{neural_net_forward.1} parent=11 // pred_region
          %s186 = ssub.s32 1024, 1024
          %187 = vsyncadd [#allocation5], %s186
          %s188 = sshll.u32 [#allocation6], 4
          %s189 = int_to_ptr.vmem [resolvable:$true] %s188
          %194 = dma.hbm_to_vmem [thread:$0]  %s3, 1024, %s189, [#allocation5], 64, 64, 4
        $region24: #{neural_net_forward.1} parent=11 // pred_fallthru
          _
        // Predicated region
        $region25: #{neural_net_forward.1} parent=11 // pred_check
          %p195 = pneg %p125
        $region26: #{neural_net_forward.1} parent=11 // pred_check_branch
          %197 = sbr.rel (%p195) target = $region28
        $region27: #{neural_net_forward.1} parent=11 // pred_region
          _
        $region28: #{neural_net_forward.1} parent=11 // pred_fallthru
          _
      $region12: #{neural_net_forward.1} parent=5 // pred_fallthru
        _
      %p198 = scmp.lt.s32.totalorder %s15, 2
      // Predicated region
      $region29: #{neural_net_forward.1} parent=5 // pred_check
        %p199 = pneg %p198
      $region30: #{neural_net_forward.1} parent=5 // pred_check_branch
        %201 = sbr.rel (%p199) target = $region32
      $region31: #{neural_net_forward.1} parent=5 // pred_region
        // Predicated region
        $region33: #{neural_net_forward.1} parent=31 // pred_check
          %p202 = pneg %p35
        $region34: #{neural_net_forward.1} parent=31 // pred_check_branch
          %204 = sbr.rel (%p202) target = $region36
        $region35: #{neural_net_forward.1} parent=31 // pred_region
          %s205 = sand.u32 %s25, 1
          %s206 = scalar_lea.sflag [#allocation3], %s205
          %s207 = sand.u32 %s25, 1
          %s208 = smul.addr %s207, 112
          %s209 = scalar_lea.vmem [#allocation2], %s208
          %s210 = smul.u32 2, %s15
          %s211 = ssub.s32 3, %s210
          %p212 = scmp.lt.s32.totalorder %s211, 2
          %s213 = scalar_select %p212, %s211, 2
          %s214 = smul.u32 128, %s213
          %s215 = smul.u32 %s214, 7
          %s217 = ssub.s32 1792, %s215
          %218 = vsyncadd %s206, %s217
          %p219 = scmp.ne.s32.totalorder 0, %s215
          %s220 = smul.addr %s210, 7
          %s221 = smul.addr %s220, 128
          %s222 = scalar_lea.hbm %s0, %s221
          %s223 = smul.u32 56, %s213
          %s224 = sshll.u32 %s209, 4
          %s225 = int_to_ptr.vmem [resolvable:$true] %s224
          %s226 = sshll.u32 %s223, 4
          %230 = dma.hbm_to_vmem [thread:$0]  (%p219), %s222, %s226, %s225, %s206, 896, 896, 56
        $region36: #{neural_net_forward.1} parent=31 // pred_fallthru
          _
      $region32: #{neural_net_forward.1} parent=5 // pred_fallthru
        _
      %p231 = scmp.le.s32.totalorder 1, %s15
      %p232 = scmp.lt.s32.totalorder %s15, 3
      %p233 = pnand %p231, %p232
      %p234 = pneg %p233
      // Predicated region
      $region37: #{neural_net_forward.1} parent=5 // pred_check
        _
      $region38: #{neural_net_forward.1} parent=5 // pred_check_branch
        %236 = sbr.rel (%p233) target = $region40
      $region39: #{neural_net_forward.1} parent=5 // pred_region
        %s237 = ssub.s32 %s15, 1
        %s238 = sand.u32 %s28, 1
        %s239 = scalar_lea.sflag [#allocation3], %s238
        %s240 = sand.u32 %s28, 1
        %s241 = smul.addr %s240, 112
        %s242 = scalar_lea.vmem [#allocation2], %s241
        // Predicated region
        $region41: #{neural_net_forward.1} parent=39 // pred_check
          %p243 = pneg %p41
        $region42: #{neural_net_forward.1} parent=39 // pred_check_branch
          %245 = sbr.rel (%p243) target = $region44
        $region43: #{neural_net_forward.1} parent=39 // pred_region
          %246 = dma.done %s239, 1792
        $region44: #{neural_net_forward.1} parent=39 // pred_fallthru
          _
        // Predicated region
        $region45: #{neural_net_forward.1} parent=39 // pred_check
          %p247 = pneg %p62
        $region46: #{neural_net_forward.1} parent=39 // pred_check_branch
          %249 = sbr.rel (%p247) target = $region48
        $region47: #{neural_net_forward.1} parent=39 // pred_region
          %250 = dma.done [#allocation5], 6272
        $region48: #{neural_net_forward.1} parent=39 // pred_fallthru
          _
        // Predicated region
        $region49: #{neural_net_forward.1} parent=39 // pred_check
          %p251 = pneg %p104
        $region50: #{neural_net_forward.1} parent=39 // pred_check_branch
          %253 = sbr.rel (%p251) target = $region52
        $region51: #{neural_net_forward.1} parent=39 // pred_region
          %254 = dma.done [#allocation5], 1024
        $region52: #{neural_net_forward.1} parent=39 // pred_fallthru
          _
        %s255 = sand.u32 %s28, 1
        %s256 = scalar_lea.sflag [#allocation3], %s255
        %s257 = sand.u32 %s28, 1
        %s258 = smul.addr %s257, 112
        %s259 = scalar_lea.vmem [#allocation2], %s258
        %p260 = pneg %p41
        %p261 = pneg %p38
        %p262 = pneg %p62
        %p263 = pneg %p59
        %p264 = pneg %p83
        %p265 = pneg %p80
        %p266 = pneg %p104
        %p267 = pneg %p101
        %p268 = pneg %p125
        %p269 = pneg %p122
        %p270 = pneg %p151
        %p271 = pneg %p148
        %s272 = smul.u32 2, %s20
        %p273 = scmp.lt.s32.totalorder %s272, 3
        %s274 = scalar_select %p273, %s272, 3
        %s275 = smul.addr %s274, 4
        %s276 = scalar_lea.vmem %s5, %s275
        %s277 = smul.u32 2, %s20
        %s278 = ssub.s32 3, %s277
        %p279 = scmp.lt.s32.totalorder %s278, 2
        %s280 = scalar_select %p279, %s278, 2
        %s281 = smul.u32 128, %s280
        %s282 = smul.u32 %s281, 7
        %s283 = smul.u32 2, %s20
        %p284 = scmp.lt.s32.totalorder %s283, 3
        %s285 = scalar_select %p284, %s283, 3
        %s286 = smul.addr %s285, 4
        %s287 = scalar_lea.vmem %s5, %s286
        %s288 = smul.u32 2, %s20
        %v290 = vld [vmem:[%s242] sm:$0xff]
        %v291 = vld [vmem:[%s242 + $0x8] sm:$0xff]
        %v292 = vld [vmem:[%s242 + $0x10] sm:$0xff]
        %v293 = vld [vmem:[%s242 + $0x18] sm:$0xff]
        %v294 = vld [vmem:[%s242 + $0x20] sm:$0xff]
        %v295 = vld [vmem:[%s242 + $0x28] sm:$0xff]
        %v296 = vld [vmem:[%s242 + $0x30] sm:$0xff]
        %v297 = vld [vmem:[%s242 + $0x38] sm:$0xff]
        %v298 = vld [vmem:[%s242 + $0x40] sm:$0xff]
        %v299 = vld [vmem:[%s242 + $0x48] sm:$0xff]
        %v300 = vld [vmem:[%s242 + $0x50] sm:$0xff]
        %v301 = vld [vmem:[%s242 + $0x58] sm:$0xff]
        %v302 = vld [vmem:[%s242 + $0x60] sm:$0xff]
        %v303 = vld [vmem:[%s242 + $0x68] sm:$0xff]
        %v304 = vpack.c.bf16 %v297, %v290
        %v305 = vpack.c.bf16 %v298, %v291
        %v306 = vpack.c.bf16 %v299, %v292
        %v307 = vpack.c.bf16 %v300, %v293
        %v308 = vpack.c.bf16 %v301, %v294
        %v309 = vpack.c.bf16 %v302, %v295
        %v310 = vpack.c.bf16 %v303, %v296
        %v311 = vld [vmem:[#allocation4] sm:$0xf]
        %v312 = vld [vmem:[#allocation4 + $0x4] sm:$0xf]
        %v313 = vld [vmem:[#allocation4 + $0x8] sm:$0xf]
        %v314 = vld [vmem:[#allocation4 + $0xc] sm:$0xf]
        %v315 = vld [vmem:[#allocation4 + $0x10] sm:$0xf]
        %v316 = vld [vmem:[#allocation4 + $0x14] sm:$0xf]
        %v317 = vld [vmem:[#allocation4 + $0x18] sm:$0xf]
        %v318 = vld [vmem:[#allocation4 + $0x1c] sm:$0xf]
        %v319 = vld [vmem:[#allocation4 + $0x20] sm:$0xf]
        %v320 = vld [vmem:[#allocation4 + $0x24] sm:$0xf]
        %v321 = vld [vmem:[#allocation4 + $0x28] sm:$0xf]
        %v322 = vld [vmem:[#allocation4 + $0x2c] sm:$0xf]
        %v323 = vld [vmem:[#allocation4 + $0x30] sm:$0xf]
        %v324 = vld [vmem:[#allocation4 + $0x34] sm:$0xf]
        %v325 = vld [vmem:[#allocation4 + $0x38] sm:$0xf]
        %v326 = vld [vmem:[#allocation4 + $0x3c] sm:$0xf]
        %v327 = vld [vmem:[#allocation4 + $0x40] sm:$0xf]
        %v328 = vld [vmem:[#allocation4 + $0x44] sm:$0xf]
        %v329 = vld [vmem:[#allocation4 + $0x48] sm:$0xf]
        %v330 = vld [vmem:[#allocation4 + $0x4c] sm:$0xf]
        %v331 = vld [vmem:[#allocation4 + $0x50] sm:$0xf]
        %v332 = vld [vmem:[#allocation4 + $0x54] sm:$0xf]
        %v333 = vld [vmem:[#allocation4 + $0x58] sm:$0xf]
        %v334 = vld [vmem:[#allocation4 + $0x5c] sm:$0xf]
        %v335 = vld [vmem:[#allocation4 + $0x60] sm:$0xf]
        %v336 = vld [vmem:[#allocation4 + $0x64] sm:$0xf]
        %v337 = vld [vmem:[#allocation4 + $0x68] sm:$0xf]
        %v338 = vld [vmem:[#allocation4 + $0x6c] sm:$0xf]
        %v339 = vld [vmem:[#allocation4 + $0x70] sm:$0xf]
        %v340 = vld [vmem:[#allocation4 + $0x74] sm:$0xf]
        %v341 = vld [vmem:[#allocation4 + $0x78] sm:$0xf]
        %v342 = vld [vmem:[#allocation4 + $0x7c] sm:$0xf]
        %v343 = vld [vmem:[#allocation4 + $0x80] sm:$0xf]
        %v344 = vld [vmem:[#allocation4 + $0x84] sm:$0xf]
        %v345 = vld [vmem:[#allocation4 + $0x88] sm:$0xf]
        %v346 = vld [vmem:[#allocation4 + $0x8c] sm:$0xf]
        %v347 = vld [vmem:[#allocation4 + $0x90] sm:$0xf]
        %v348 = vld [vmem:[#allocation4 + $0x94] sm:$0xf]
        %v349 = vld [vmem:[#allocation4 + $0x98] sm:$0xf]
        %v350 = vld [vmem:[#allocation4 + $0x9c] sm:$0xf]
        %v351 = vld [vmem:[#allocation4 + $0xa0] sm:$0xf]
        %v352 = vld [vmem:[#allocation4 + $0xa4] sm:$0xf]
        %v353 = vld [vmem:[#allocation4 + $0xa8] sm:$0xf]
        %v354 = vld [vmem:[#allocation4 + $0xac] sm:$0xf]
        %v355 = vld [vmem:[#allocation4 + $0xb0] sm:$0xf]
        %v356 = vld [vmem:[#allocation4 + $0xb4] sm:$0xf]
        %v357 = vld [vmem:[#allocation4 + $0xb8] sm:$0xf]
        %v358 = vld [vmem:[#allocation4 + $0xbc] sm:$0xf]
        %v359 = vld [vmem:[#allocation4 + $0xc0] sm:$0xf]
        %v360 = vld [vmem:[#allocation4 + $0xc4] sm:$0xf]
        %v361 = vld [vmem:[#allocation4 + $0xc8] sm:$0xf]
        %v362 = vld [vmem:[#allocation4 + $0xcc] sm:$0xf]
        %v363 = vld [vmem:[#allocation4 + $0xd0] sm:$0xf]
        %v364 = vld [vmem:[#allocation4 + $0xd4] sm:$0xf]
        %v365 = vld [vmem:[#allocation4 + $0xd8] sm:$0xf]
        %v366 = vld [vmem:[#allocation4 + $0xdc] sm:$0xf]
        %v367 = vld [vmem:[#allocation4 + $0xe0] sm:$0xf]
        %v368 = vld [vmem:[#allocation4 + $0xe4] sm:$0xf]
        %v369 = vld [vmem:[#allocation4 + $0xe8] sm:$0xf]
        %v370 = vld [vmem:[#allocation4 + $0xec] sm:$0xf]
        %v371 = vld [vmem:[#allocation4 + $0xf0] sm:$0xf]
        %v372 = vld [vmem:[#allocation4 + $0xf4] sm:$0xf]
        %v373 = vld [vmem:[#allocation4 + $0xf8] sm:$0xf]
        %v374 = vld [vmem:[#allocation4 + $0xfc] sm:$0xf]
        %v375 = vld [vmem:[#allocation4 + $0x100] sm:$0xf]
        %v376 = vld [vmem:[#allocation4 + $0x104] sm:$0xf]
        %v377 = vld [vmem:[#allocation4 + $0x108] sm:$0xf]
        %v378 = vld [vmem:[#allocation4 + $0x10c] sm:$0xf]
        %v379 = vld [vmem:[#allocation4 + $0x110] sm:$0xf]
        %v380 = vld [vmem:[#allocation4 + $0x114] sm:$0xf]
        %v381 = vld [vmem:[#allocation4 + $0x118] sm:$0xf]
        %v382 = vld [vmem:[#allocation4 + $0x11c] sm:$0xf]
        %v383 = vld [vmem:[#allocation4 + $0x120] sm:$0xf]
        %v384 = vld [vmem:[#allocation4 + $0x124] sm:$0xf]
        %v385 = vld [vmem:[#allocation4 + $0x128] sm:$0xf]
        %v386 = vld [vmem:[#allocation4 + $0x12c] sm:$0xf]
        %v387 = vld [vmem:[#allocation4 + $0x130] sm:$0xf]
        %v388 = vld [vmem:[#allocation4 + $0x134] sm:$0xf]
        %v389 = vld [vmem:[#allocation4 + $0x138] sm:$0xf]
        %v390 = vld [vmem:[#allocation4 + $0x13c] sm:$0xf]
        %v391 = vld [vmem:[#allocation4 + $0x140] sm:$0xf]
        %v392 = vld [vmem:[#allocation4 + $0x144] sm:$0xf]
        %v393 = vld [vmem:[#allocation4 + $0x148] sm:$0xf]
        %v394 = vld [vmem:[#allocation4 + $0x14c] sm:$0xf]
        %v395 = vld [vmem:[#allocation4 + $0x150] sm:$0xf]
        %v396 = vld [vmem:[#allocation4 + $0x154] sm:$0xf]
        %v397 = vld [vmem:[#allocation4 + $0x158] sm:$0xf]
        %v398 = vld [vmem:[#allocation4 + $0x15c] sm:$0xf]
        %v399 = vld [vmem:[#allocation4 + $0x160] sm:$0xf]
        %v400 = vld [vmem:[#allocation4 + $0x164] sm:$0xf]
        %v401 = vld [vmem:[#allocation4 + $0x168] sm:$0xf]
        %v402 = vld [vmem:[#allocation4 + $0x16c] sm:$0xf]
        %v403 = vld [vmem:[#allocation4 + $0x170] sm:$0xf]
        %v404 = vld [vmem:[#allocation4 + $0x174] sm:$0xf]
        %v405 = vld [vmem:[#allocation4 + $0x178] sm:$0xf]
        %v406 = vld [vmem:[#allocation4 + $0x17c] sm:$0xf]
        %v407 = vld [vmem:[#allocation4 + $0x180] sm:$0xf]
        %v408 = vld [vmem:[#allocation4 + $0x184] sm:$0xf]
        %v409 = vld [vmem:[%s2] sm:$0x1]
        %v411 = vlaneseq
        %v412 = vshrl.u32 %v411, 7
        %v413 = vsub.s32 0, %v412
        %v414 = vrot.slane %v409, %v413
        %v514 = vunpack.c.l.b16 %v311
        %v515 = vunpack.c.l.b16 %v312
        %v516 = vunpack.c.l.b16 %v313
        %v517 = vunpack.c.l.b16 %v314
        %v518 = vunpack.c.l.b16 %v315
        %v519 = vunpack.c.l.b16 %v316
        %v520 = vunpack.c.l.b16 %v317
        %v521 = vunpack.c.l.b16 %v318
        %v522 = vunpack.c.l.b16 %v319
        %v523 = vunpack.c.l.b16 %v320
        %v524 = vunpack.c.l.b16 %v321
        %v525 = vunpack.c.l.b16 %v322
        %v526 = vunpack.c.l.b16 %v323
        %v527 = vunpack.c.l.b16 %v324
        %v528 = vunpack.c.l.b16 %v325
        %v529 = vunpack.c.l.b16 %v326
        %v530 = vunpack.c.l.b16 %v327
        %v531 = vunpack.c.l.b16 %v328
        %v532 = vunpack.c.l.b16 %v329
        %v533 = vunpack.c.l.b16 %v330
        %v534 = vunpack.c.l.b16 %v331
        %v535 = vunpack.c.l.b16 %v332
        %v536 = vunpack.c.l.b16 %v333
        %v537 = vunpack.c.l.b16 %v334
        %v538 = vunpack.c.l.b16 %v335
        %v539 = vunpack.c.l.b16 %v336
        %v540 = vunpack.c.l.b16 %v337
        %v541 = vunpack.c.l.b16 %v338
        %v542 = vunpack.c.l.b16 %v339
        %v543 = vunpack.c.l.b16 %v340
        %v544 = vunpack.c.l.b16 %v341
        %v545 = vunpack.c.l.b16 %v342
        %v546 = vunpack.c.l.b16 %v343
        %v547 = vunpack.c.l.b16 %v344
        %v548 = vunpack.c.l.b16 %v345
        %v549 = vunpack.c.l.b16 %v346
        %v550 = vunpack.c.l.b16 %v347
        %v551 = vunpack.c.l.b16 %v348
        %v552 = vunpack.c.l.b16 %v349
        %v553 = vunpack.c.l.b16 %v350
        %v554 = vunpack.c.l.b16 %v351
        %v555 = vunpack.c.l.b16 %v352
        %v556 = vunpack.c.l.b16 %v353
        %v557 = vunpack.c.l.b16 %v354
        %v558 = vunpack.c.l.b16 %v355
        %v559 = vunpack.c.l.b16 %v356
        %v560 = vunpack.c.l.b16 %v357
        %v561 = vunpack.c.l.b16 %v358
        %v562 = vunpack.c.l.b16 %v359
        %v563 = vunpack.c.l.b16 %v360
        %v564 = vunpack.c.l.b16 %v361
        %v565 = vunpack.c.l.b16 %v362
        %v566 = vunpack.c.l.b16 %v363
        %v567 = vunpack.c.l.b16 %v364
        %v568 = vunpack.c.l.b16 %v365
        %v569 = vunpack.c.l.b16 %v366
        %v570 = vunpack.c.l.b16 %v367
        %v571 = vunpack.c.l.b16 %v368
        %v572 = vunpack.c.l.b16 %v369
        %v573 = vunpack.c.l.b16 %v370
        %v574 = vunpack.c.l.b16 %v371
        %v575 = vunpack.c.l.b16 %v372
        %v576 = vunpack.c.l.b16 %v373
        %v577 = vunpack.c.l.b16 %v374
        %v578 = vunpack.c.l.b16 %v375
        %v579 = vunpack.c.l.b16 %v376
        %v580 = vunpack.c.l.b16 %v377
        %v581 = vunpack.c.l.b16 %v378
        %v582 = vunpack.c.l.b16 %v379
        %v583 = vunpack.c.l.b16 %v380
        %v584 = vunpack.c.l.b16 %v381
        %v585 = vunpack.c.l.b16 %v382
        %v586 = vunpack.c.l.b16 %v383
        %v587 = vunpack.c.l.b16 %v384
        %v588 = vunpack.c.l.b16 %v385
        %v589 = vunpack.c.l.b16 %v386
        %v590 = vunpack.c.l.b16 %v387
        %v591 = vunpack.c.l.b16 %v388
        %v592 = vunpack.c.l.b16 %v389
        %v593 = vunpack.c.l.b16 %v390
        %v594 = vunpack.c.l.b16 %v391
        %v595 = vunpack.c.l.b16 %v392
        %v596 = vunpack.c.l.b16 %v393
        %v597 = vunpack.c.l.b16 %v394
        %v598 = vunpack.c.l.b16 %v395
        %v599 = vunpack.c.l.b16 %v396
        %v600 = vunpack.c.l.b16 %v397
        %v601 = vunpack.c.l.b16 %v398
        %v602 = vunpack.c.l.b16 %v399
        %v603 = vunpack.c.l.b16 %v400
        %v604 = vunpack.c.l.b16 %v401
        %v605 = vunpack.c.l.b16 %v402
        %v606 = vunpack.c.l.b16 %v403
        %v607 = vunpack.c.l.b16 %v404
        %v608 = vunpack.c.l.b16 %v405
        %v609 = vunpack.c.l.b16 %v406
        %v610 = vunpack.c.l.b16 %v407
        %v611 = vunpack.c.l.b16 %v408
        %v612 = vpack.c.b16 %v515, %v514
        %v613 = vpack.c.b16 %v517, %v516
        %v614 = vpack.c.b16 %v519, %v518
        %v615 = vpack.c.b16 %v521, %v520
        %v616 = vpack.c.b16 %v523, %v522
        %v617 = vpack.c.b16 %v525, %v524
        %v618 = vpack.c.b16 %v527, %v526
        %v619 = vpack.c.b16 %v529, %v528
        %v620 = vpack.c.b16 %v531, %v530
        %v621 = vpack.c.b16 %v533, %v532
        %v622 = vpack.c.b16 %v535, %v534
        %v623 = vpack.c.b16 %v537, %v536
        %v624 = vpack.c.b16 %v539, %v538
        %v625 = vpack.c.b16 %v541, %v540
        %v626 = vpack.c.b16 %v543, %v542
        %v627 = vpack.c.b16 %v545, %v544
        %v628 = vpack.c.b16 %v547, %v546
        %v629 = vpack.c.b16 %v549, %v548
        %v630 = vpack.c.b16 %v551, %v550
        %v631 = vpack.c.b16 %v553, %v552
        %v632 = vpack.c.b16 %v555, %v554
        %v633 = vpack.c.b16 %v557, %v556
        %v634 = vpack.c.b16 %v559, %v558
        %v635 = vpack.c.b16 %v561, %v560
        %v636 = vpack.c.b16 %v563, %v562
        %v637 = vpack.c.b16 %v565, %v564
        %v638 = vpack.c.b16 %v567, %v566
        %v639 = vpack.c.b16 %v569, %v568
        %v640 = vpack.c.b16 %v571, %v570
        %v641 = vpack.c.b16 %v573, %v572
        %v642 = vpack.c.b16 %v575, %v574
        %v643 = vpack.c.b16 %v577, %v576
        %v644 = vpack.c.b16 %v579, %v578
        %v645 = vpack.c.b16 %v581, %v580
        %v646 = vpack.c.b16 %v583, %v582
        %v647 = vpack.c.b16 %v585, %v584
        %v648 = vpack.c.b16 %v587, %v586
        %v649 = vpack.c.b16 %v589, %v588
        %v650 = vpack.c.b16 %v591, %v590
        %v651 = vpack.c.b16 %v593, %v592
        %v652 = vpack.c.b16 %v595, %v594
        %v653 = vpack.c.b16 %v597, %v596
        %v654 = vpack.c.b16 %v599, %v598
        %v655 = vpack.c.b16 %v601, %v600
        %v656 = vpack.c.b16 %v603, %v602
        %v657 = vpack.c.b16 %v605, %v604
        %v658 = vpack.c.b16 %v607, %v606
        %v659 = vpack.c.b16 %v609, %v608
        %v660 = vpack.c.b16 %v611, %v610
        %vm710 = vcmask 130048
        %v712 = vsel %vm710, %v310, 0
        %714 = vmatprep.subr.bf16.mxu0 0
        %715 = vmatpush1.bf16.msra.mxu0 %v619
        %716 = vmatprep.subr.bf16.mxu0 0
        %717 = vmatpush1.bf16.msra.mxu0 %v618
        %718 = vmatprep.subr.bf16.mxu0 0
        %719 = vmatpush1.bf16.msra.mxu0 %v617
        %720 = vmatprep.subr.bf16.mxu0 0
        %721 = vmatpush1.bf16.msra.mxu0 %v616
        %722 = vmatprep.subr.bf16.mxu0 0
        %723 = vmatpush1.bf16.msra.mxu0 %v615
        %724 = vmatprep.subr.bf16.mxu0 0
        %725 = vmatpush1.bf16.msra.mxu0 %v614
        %726 = vmatprep.subr.bf16.mxu0 0
        %727 = vmatpush1.bf16.msra.mxu0 %v613
        %728 = vmatprep.subr.bf16.mxu0 0
        %729 = vmatpush1.bf16.msra.mxu0 %v612
        %730 = vmatprep.subr.bf16.mxu0 0
        %731 = vmatpush2.bf16.msra.mxu0 %v627
        %732 = vmatprep.subr.bf16.mxu0 0
        %733 = vmatpush2.bf16.msra.mxu0 %v626
        %734 = vmatprep.subr.bf16.mxu0 0
        %735 = vmatpush2.bf16.msra.mxu0 %v625
        %736 = vmatprep.subr.bf16.mxu0 0
        %737 = vmatpush2.bf16.msra.mxu0 %v624
        %738 = vmatprep.subr.bf16.mxu0 0
        %739 = vmatpush2.bf16.msra.mxu0 %v623
        %740 = vmatprep.subr.bf16.mxu0 0
        %741 = vmatpush2.bf16.msra.mxu0 %v622
        %742 = vmatprep.subr.bf16.mxu0 0
        %743 = vmatpush2.bf16.msra.mxu0 %v621
        %744 = vmatprep.subr.bf16.mxu0 0
        %745 = vmatpush2.bf16.msra.mxu0 %v620
        %746 = vmatprep.mubr.bf16.mxu0 %v305
        %747 = vmatmul.mubr.bf16.gmra.mxu0 %v304
        %v748 = vpop.f32.mrf.mxu0
        %v749 = vadd.f32 %v414, %v748
        %v750 = vpop.f32.mrf.mxu0
        %v751 = vpop.f32.mrf.mxu0
        %v752 = vadd.f32 %v414, %v751
        %v753 = vpop.f32.mrf.mxu0
        %754 = vdwg.mxu0
        %755 = vmatprep.subr.bf16.mxu0 0
        %756 = vmatpush1.bf16.msra.mxu0 %v635
        %757 = vmatprep.subr.bf16.mxu0 0
        %758 = vmatpush1.bf16.msra.mxu0 %v634
        %759 = vmatprep.subr.bf16.mxu0 0
        %760 = vmatpush1.bf16.msra.mxu0 %v633
        %761 = vmatprep.subr.bf16.mxu0 0
        %762 = vmatpush1.bf16.msra.mxu0 %v632
        %763 = vmatprep.subr.bf16.mxu0 0
        %764 = vmatpush1.bf16.msra.mxu0 %v631
        %765 = vmatprep.subr.bf16.mxu0 0
        %766 = vmatpush1.bf16.msra.mxu0 %v630
        %767 = vmatprep.subr.bf16.mxu0 0
        %768 = vmatpush1.bf16.msra.mxu0 %v629
        %769 = vmatprep.subr.bf16.mxu0 0
        %770 = vmatpush1.bf16.msra.mxu0 %v628
        %771 = vmatprep.subr.bf16.mxu0 0
        %772 = vmatpush2.bf16.msra.mxu0 %v643
        %773 = vmatprep.subr.bf16.mxu0 0
        %774 = vmatpush2.bf16.msra.mxu0 %v642
        %775 = vmatprep.subr.bf16.mxu0 0
        %776 = vmatpush2.bf16.msra.mxu0 %v641
        %777 = vmatprep.subr.bf16.mxu0 0
        %778 = vmatpush2.bf16.msra.mxu0 %v640
        %779 = vmatprep.subr.bf16.mxu0 0
        %780 = vmatpush2.bf16.msra.mxu0 %v639
        %781 = vmatprep.subr.bf16.mxu0 0
        %782 = vmatpush2.bf16.msra.mxu0 %v638
        %783 = vmatprep.subr.bf16.mxu0 0
        %784 = vmatpush2.bf16.msra.mxu0 %v637
        %785 = vmatprep.subr.bf16.mxu0 0
        %786 = vmatpush2.bf16.msra.mxu0 %v636
        %787 = vmatprep.mubr.bf16.mxu0 %v307
        %788 = vmatmul.mubr.bf16.gmra.mxu0 %v306
        %v789 = vpop.f32.mrf.mxu0
        %v790 = vadd.f32 %v749, %v789
        %v791 = vpop.f32.mrf.mxu0
        %v792 = vpop.f32.mrf.mxu0
        %v793 = vadd.f32 %v752, %v792
        %v794 = vpop.f32.mrf.mxu0
        %795 = vdwg.mxu0
        %796 = vmatprep.subr.bf16.mxu0 0
        %797 = vmatpush1.bf16.msra.mxu0 %v651
        %798 = vmatprep.subr.bf16.mxu0 0
        %799 = vmatpush1.bf16.msra.mxu0 %v650
        %800 = vmatprep.subr.bf16.mxu0 0
        %801 = vmatpush1.bf16.msra.mxu0 %v649
        %802 = vmatprep.subr.bf16.mxu0 0
        %803 = vmatpush1.bf16.msra.mxu0 %v648
        %804 = vmatprep.subr.bf16.mxu0 0
        %805 = vmatpush1.bf16.msra.mxu0 %v647
        %806 = vmatprep.subr.bf16.mxu0 0
        %807 = vmatpush1.bf16.msra.mxu0 %v646
        %808 = vmatprep.subr.bf16.mxu0 0
        %809 = vmatpush1.bf16.msra.mxu0 %v645
        %810 = vmatprep.subr.bf16.mxu0 0
        %811 = vmatpush1.bf16.msra.mxu0 %v644
        %812 = vmatprep.subr.bf16.mxu0 0
        %813 = vmatpush2.bf16.msra.mxu0 %v659
        %814 = vmatprep.subr.bf16.mxu0 0
        %815 = vmatpush2.bf16.msra.mxu0 %v658
        %816 = vmatprep.subr.bf16.mxu0 0
        %817 = vmatpush2.bf16.msra.mxu0 %v657
        %818 = vmatprep.subr.bf16.mxu0 0
        %819 = vmatpush2.bf16.msra.mxu0 %v656
        %820 = vmatprep.subr.bf16.mxu0 0
        %821 = vmatpush2.bf16.msra.mxu0 %v655
        %822 = vmatprep.subr.bf16.mxu0 0
        %823 = vmatpush2.bf16.msra.mxu0 %v654
        %824 = vmatprep.subr.bf16.mxu0 0
        %825 = vmatpush2.bf16.msra.mxu0 %v653
        %826 = vmatprep.subr.bf16.mxu0 0
        %827 = vmatpush2.bf16.msra.mxu0 %v652
        %828 = vmatprep.mubr.bf16.mxu0 %v309
        %829 = vmatmul.mubr.bf16.gmra.mxu0 %v308
        %v830 = vpop.f32.mrf.mxu0
        %v831 = vadd.f32 %v790, %v830
        %v832 = vpop.f32.mrf.mxu0
        %v833 = vpop.f32.mrf.mxu0
        %v834 = vadd.f32 %v793, %v833
        %v835 = vpop.f32.mrf.mxu0
        %836 = vdwg.mxu0
        %837 = vmatprep.subr.bf16.mxu0 0
        %838 = vmatpush1.bf16.msra.mxu0 0
        %839 = vmatprep.subr.bf16.mxu0 0
        %840 = vmatpush1.bf16.msra.mxu0 0
        %841 = vmatprep.subr.bf16.mxu0 0
        %842 = vmatpush1.bf16.msra.mxu0 0
        %843 = vmatprep.subr.bf16.mxu0 0
        %844 = vmatpush1.bf16.msra.mxu0 0
        %845 = vmatprep.subr.bf16.mxu0 0
        %846 = vmatpush1.bf16.msra.mxu0 0
        %847 = vmatprep.subr.bf16.mxu0 0
        %848 = vmatpush1.bf16.msra.mxu0 0
        %849 = vmatprep.subr.bf16.mxu0 0
        %850 = vmatpush1.bf16.msra.mxu0 0
        %851 = vmatprep.subr.bf16.mxu0 0
        %852 = vmatpush1.bf16.msra.mxu0 %v660
        %853 = vmatprep.subr.bf16.mxu0 0
        %854 = vmatpush2.bf16.msra.mxu0 0
        %855 = vmatprep.subr.bf16.mxu0 0
        %856 = vmatpush2.bf16.msra.mxu0 0
        %857 = vmatprep.subr.bf16.mxu0 0
        %858 = vmatpush2.bf16.msra.mxu0 0
        %859 = vmatprep.subr.bf16.mxu0 0
        %860 = vmatpush2.bf16.msra.mxu0 0
        %861 = vmatprep.subr.bf16.mxu0 0
        %862 = vmatpush2.bf16.msra.mxu0 0
        %863 = vmatprep.subr.bf16.mxu0 0
        %864 = vmatpush2.bf16.msra.mxu0 0
        %865 = vmatprep.subr.bf16.mxu0 0
        %866 = vmatpush2.bf16.msra.mxu0 0
        %867 = vmatprep.subr.bf16.mxu0 0
        %868 = vmatpush2.bf16.msra.mxu0 0
        %869 = vmatprep.mubr.bf16.mxu0 0
        %870 = vmatmul.mubr.bf16.gmra.mxu0 %v712
        %v871 = vpop.f32.mrf.mxu0
        %v872 = vadd.f32 %v831, %v871
        %v873 = vpop.f32.mrf.mxu0
        %v874 = vpop.f32.mrf.mxu0
        %v875 = vadd.f32 %v834, %v874
        %v876 = vpop.f32.mrf.mxu0
        %877 = vdwg.mxu0
        %v878 = vmax.f32 %v872, 0.0
        %v879 = vmax.f32 %v875, 0.0
        %v880 = vpack.c.bf16 %v879, %v878
        %v881 = vld [vmem:[#allocation6] sm:$0xf]
        %v882 = vld [vmem:[#allocation6 + $0x4] sm:$0xf]
        %v883 = vld [vmem:[#allocation6 + $0x8] sm:$0xf]
        %v884 = vld [vmem:[#allocation6 + $0xc] sm:$0xf]
        %v885 = vld [vmem:[#allocation6 + $0x10] sm:$0xf]
        %v886 = vld [vmem:[#allocation6 + $0x14] sm:$0xf]
        %v887 = vld [vmem:[#allocation6 + $0x18] sm:$0xf]
        %v888 = vld [vmem:[#allocation6 + $0x1c] sm:$0xf]
        %v889 = vld [vmem:[#allocation6 + $0x20] sm:$0xf]
        %v890 = vld [vmem:[#allocation6 + $0x24] sm:$0xf]
        %v891 = vld [vmem:[#allocation6 + $0x28] sm:$0xf]
        %v892 = vld [vmem:[#allocation6 + $0x2c] sm:$0xf]
        %v893 = vld [vmem:[#allocation6 + $0x30] sm:$0xf]
        %v894 = vld [vmem:[#allocation6 + $0x34] sm:$0xf]
        %v895 = vld [vmem:[#allocation6 + $0x38] sm:$0xf]
        %v896 = vld [vmem:[#allocation6 + $0x3c] sm:$0xf]
        %v897 = vld [vmem:[%s4] sm:$0x1]
        %v899 = vlaneseq
        %v900 = vshrl.u32 %v899, 7
        %v901 = vsub.s32 0, %v900
        %v902 = vrot.slane %v897, %v901
        %v920 = vunpack.c.l.b16 %v881
        %v921 = vunpack.c.l.b16 %v882
        %v922 = vunpack.c.l.b16 %v883
        %v923 = vunpack.c.l.b16 %v884
        %v924 = vunpack.c.l.b16 %v885
        %v925 = vunpack.c.l.b16 %v886
        %v926 = vunpack.c.l.b16 %v887
        %v927 = vunpack.c.l.b16 %v888
        %v928 = vunpack.c.l.b16 %v889
        %v929 = vunpack.c.l.b16 %v890
        %v930 = vunpack.c.l.b16 %v891
        %v931 = vunpack.c.l.b16 %v892
        %v932 = vunpack.c.l.b16 %v893
        %v933 = vunpack.c.l.b16 %v894
        %v934 = vunpack.c.l.b16 %v895
        %v935 = vunpack.c.l.b16 %v896
        %v936 = vpack.c.b16 %v921, %v920
        %v937 = vpack.c.b16 %v923, %v922
        %v938 = vpack.c.b16 %v925, %v924
        %v939 = vpack.c.b16 %v927, %v926
        %v940 = vpack.c.b16 %v929, %v928
        %v941 = vpack.c.b16 %v931, %v930
        %v942 = vpack.c.b16 %v933, %v932
        %v943 = vpack.c.b16 %v935, %v934
        %952 = vmatprep.subr.bf16.mxu0 0
        %953 = vmatpush1.bf16.msra.mxu0 %v943
        %954 = vmatprep.subr.bf16.mxu0 0
        %955 = vmatpush1.bf16.msra.mxu0 %v942
        %956 = vmatprep.subr.bf16.mxu0 0
        %957 = vmatpush1.bf16.msra.mxu0 %v941
        %958 = vmatprep.subr.bf16.mxu0 0
        %959 = vmatpush1.bf16.msra.mxu0 %v940
        %960 = vmatprep.subr.bf16.mxu0 0
        %961 = vmatpush1.bf16.msra.mxu0 %v939
        %962 = vmatprep.subr.bf16.mxu0 0
        %963 = vmatpush1.bf16.msra.mxu0 %v938
        %964 = vmatprep.subr.bf16.mxu0 0
        %965 = vmatpush1.bf16.msra.mxu0 %v937
        %966 = vmatprep.subr.bf16.mxu0 0
        %967 = vmatpush1.bf16.msra.mxu0 %v936
        %968 = vmatprep.subr.bf16.mxu0 0
        %969 = vmatpush2.bf16.msra.mxu0 0
        %970 = vmatprep.subr.bf16.mxu0 0
        %971 = vmatpush2.bf16.msra.mxu0 0
        %972 = vmatprep.subr.bf16.mxu0 0
        %973 = vmatpush2.bf16.msra.mxu0 0
        %974 = vmatprep.subr.bf16.mxu0 0
        %975 = vmatpush2.bf16.msra.mxu0 0
        %976 = vmatprep.subr.bf16.mxu0 0
        %977 = vmatpush2.bf16.msra.mxu0 0
        %978 = vmatprep.subr.bf16.mxu0 0
        %979 = vmatpush2.bf16.msra.mxu0 0
        %980 = vmatprep.subr.bf16.mxu0 0
        %981 = vmatpush2.bf16.msra.mxu0 0
        %982 = vmatprep.subr.bf16.mxu0 0
        %983 = vmatpush2.bf16.msra.mxu0 0
        %984 = vmatprep.mubr.bf16.mxu0 0
        %985 = vmatmul.mubr.bf16.gmra.mxu0 %v880
        %v986 = vpop.f32.mrf.mxu0
        %v987 = vadd.f32 %v902, %v986
        %v988 = vpop.f32.mrf.mxu0
        %v989 = vpop.f32.mrf.mxu0
        %v990 = vadd.f32 %v902, %v989
        %v991 = vpop.f32.mrf.mxu0
        %992 = vdwg.mxu0
        %v993 = vpack.c.bf16 %v990, %v987
        %v995 = vunpack.c.l.b16 %v993
        %v996 = vunpack.c.h.b16 %v993
        %v997 = vpack.c.b16 %v995, %v995
        %v998 = vpack.c.b16 %v996, %v996
        %1001 = vst [vmem:[%s287] sm:$0xf] %v997
        %1002 = vst [vmem:[%s287 + $0x4] sm:$0xf] %v998
        %s1003 = smul.u32 2, %s20
        %p1004 = scmp.lt.s32.totalorder %s1003, 3
        %s1005 = scalar_select %p1004, %s1003, 3
        %s1006 = smul.addr %s1005, 4
        %s1007 = scalar_lea.vmem %s5, %s1006
        // Predicated region
        $region53: #{neural_net_forward.1} parent=39 // pred_check
          %p1008 = pneg %p148
        $region54: #{neural_net_forward.1} parent=39 // pred_check_branch
          %1010 = sbr.rel (%p1008) target = $region56
        $region55: #{neural_net_forward.1} parent=39 // pred_region
          %s1011 = smul.u32 2, %s20
        $region56: #{neural_net_forward.1} parent=39 // pred_fallthru
          _
      $region40: #{neural_net_forward.1} parent=5 // pred_fallthru
        _
      %p1012 = scmp.le.s32.totalorder 2, %s15
      // Predicated region
      $region57: #{neural_net_forward.1} parent=5 // pred_check
        %p1013 = pneg %p1012
      $region58: #{neural_net_forward.1} parent=5 // pred_check_branch
        %1015 = sbr.rel (%p1013) target = $region60
      $region59: #{neural_net_forward.1} parent=5 // pred_region
        %s1016 = ssub.s32 %s15, 2
        // Predicated region
        $region61: #{neural_net_forward.1} parent=59 // pred_check
          %p1017 = pneg %p154
        $region62: #{neural_net_forward.1} parent=59 // pred_check_branch
          %1019 = sbr.rel (%p1017) target = $region64
        $region63: #{neural_net_forward.1} parent=59 // pred_region
          %s1020 = smul.u32 2, %s21
          %p1021 = scmp.lt.s32.totalorder %s1020, 3
          %s1022 = scalar_select %p1021, %s1020, 3
          %s1023 = smul.addr %s1022, 4
          %s1024 = scalar_lea.vmem %s5, %s1023
        $region64: #{neural_net_forward.1} parent=59 // pred_fallthru
          _
      $region60: #{neural_net_forward.1} parent=5 // pred_fallthru
        _
    $region6: #{neural_net_forward.1} parent=1 // loop_footer
      %s19 = sadd.s32 1, %s15
    $region7: #{neural_net_forward.1} parent=1 // loop_footer_branch
      %14 = sbr.rel target = $region3
    $region8: #{neural_net_forward.1} parent=1 // loop_exit
      _
    %1025 = vsyncpa [#allocation3], 1
    %s1026 = scalar_lea.sflag [#allocation3], 1
    %1027 = vsyncpa %s1026, 1
    %1028 = vsyncpa [#allocation5], 1

</llo_original>
